<compile_context>
chip_gen: v7x
topology: tpu7x:2x2x1
jax: 0.10.0
libtpu: 0.0.40
codegen_flags: <defaults>
</compile_context>

<pallas_src>
import functools

import jax
import jax.numpy as jnp
from jax.experimental import pallas as pl
from jax.experimental.pallas import tpu as pltpu


def _pad_full_kernel(x_ref, o_ref, *, pad, in_shape):
    """x_ref: (1, D, H, W) VMEM block; o_ref: (1, D_out, H_out, W_out) block."""
    x_a, x_b, y_a, y_b, z_a, z_b = pad
    D, H, W = in_shape
    _, D_out, H_out, W_out = o_ref.shape
    dt = o_ref.dtype

    # Zero only the border regions.  All slices are static; branches whose pad
    # is zero are skipped entirely at trace time.
    if z_a > 0:
        o_ref[0, 0:z_a, :, :] = jnp.zeros((z_a, H_out, W_out), dt)
    if z_b > 0:
        o_ref[0, z_a + D:D_out, :, :] = jnp.zeros((z_b, H_out, W_out), dt)
    if y_a > 0:
        o_ref[0, z_a:z_a + D, 0:y_a, :] = jnp.zeros((D, y_a, W_out), dt)
    if y_b > 0:
        o_ref[0, z_a:z_a + D, y_a + H:H_out, :] = jnp.zeros((D, y_b, W_out), dt)
    if x_a > 0:
        o_ref[0, z_a:z_a + D, y_a:y_a + H, 0:x_a] = jnp.zeros((D, H, x_a), dt)
    if x_b > 0:
        o_ref[0, z_a:z_a + D, y_a:y_a + H, x_a + W:W_out] = jnp.zeros((D, H, x_b), dt)

    # Interior: one large direct store at a static offset (no padded slab in
    # registers, interior written exactly once).
    o_ref[0, z_a:z_a + D, y_a:y_a + H, x_a:x_a + W] = x_ref[0]


def _pad_slice_kernel(x_ref, o_ref, *, pad, in_depth, in_hw):
    """Fallback: x_ref (1, 1, H, W); o_ref (1, 1, H_out, W_out); grid (N*C, D_out)."""
    x_a, x_b, y_a, y_b, z_a, z_b = pad
    H, W = in_hw
    H_out, W_out = o_ref.shape[-2], o_ref.shape[-1]
    dt = o_ref.dtype

    d = pl.program_id(1)
    valid = jnp.logical_and(d >= z_a, d < z_a + in_depth)

    @pl.when(valid)
    def _():
        if y_a > 0:
            o_ref[0, 0, 0:y_a, :] = jnp.zeros((y_a, W_out), dt)
        if y_b > 0:
            o_ref[0, 0, y_a + H:H_out, :] = jnp.zeros((y_b, W_out), dt)
        if x_a > 0:
            o_ref[0, 0, y_a:y_a + H, 0:x_a] = jnp.zeros((H, x_a), dt)
        if x_b > 0:
            o_ref[0, 0, y_a:y_a + H, x_a + W:W_out] = jnp.zeros((H, x_b), dt)
        o_ref[0, 0, y_a:y_a + H, x_a:x_a + W] = x_ref[0, 0]

    @pl.when(jnp.logical_not(valid))
    def _():
        o_ref[...] = jnp.zeros_like(o_ref)


def zero_pad3d(x, pad, *, max_block_bytes=16 * 1024 * 1024):
    """Pallas implementation of ZeroPad3d.forward for NCDHW input.

    pad = (x_a, x_b, y_a, y_b, z_a, z_b), all non-negative.
    `max_block_bytes` bounds the (input block + output block) bytes per grid
    step; the pipeline double-buffers, so VMEM use is ~2x this plus margin
    (default keeps it well under v7x's 64 MiB; raise on v5e/v6e if desired).
    """
    assert len(pad) == 6
    assert all(p >= 0 for p in pad), "negative (cropping) pads not supported"
    x_a, x_b, y_a, y_b, z_a, z_b = pad

    N, C, D, H, W = x.shape
    D_out = D + z_a + z_b
    H_out = H + y_a + y_b
    W_out = W + x_a + x_b

    x2 = x.reshape(N * C, D, H, W)
    itemsize = jnp.dtype(x.dtype).itemsize
    out_shape = jax.ShapeDtypeStruct((N * C, D_out, H_out, W_out), x.dtype)

    full_block_bytes = (D * H * W + D_out * H_out * W_out) * itemsize

    if full_block_bytes <= max_block_bytes:
        # Primary path: one whole (n, c) volume per grid step.
        vmem_limit = max(32 * 1024 * 1024, 2 * full_block_bytes + (4 << 20))
        kernel = functools.partial(_pad_full_kernel, pad=pad, in_shape=(D, H, W))
        out2 = pl.pallas_call(
            kernel,
            out_shape=out_shape,
            grid_spec=pltpu.PrefetchScalarGridSpec(
                num_scalar_prefetch=0,
                grid=(N * C,),
                in_specs=[pl.BlockSpec((1, D, H, W), lambda b: (b, 0, 0, 0))],
                out_specs=pl.BlockSpec((1, D_out, H_out, W_out),
                                       lambda b: (b, 0, 0, 0)),
            ),
            compiler_params=pltpu.CompilerParams(
                dimension_semantics=("parallel",),
                vmem_limit_bytes=int(vmem_limit)),
        )(x2)
    else:
        # Fallback for very large per-(n, c) volumes: one (H_out, W_out) slab
        # per step.  Note: the clamped input index still fetches an (unused)
        # slab for pure-padding depth slices; acceptable since this path is
        # only hit when H*W slabs are already large (good DMA granularity).
        slab_bytes = (H * W + H_out * W_out) * itemsize
        vmem_limit = max(32 * 1024 * 1024, 2 * slab_bytes + (4 << 20))

        def in_index_map(b, d):
            return (b, jnp.clip(d - z_a, 0, D - 1), 0, 0)

        kernel = functools.partial(_pad_slice_kernel, pad=pad,
                                   in_depth=D, in_hw=(H, W))
        out2 = pl.pallas_call(
            kernel,
            out_shape=out_shape,
            grid_spec=pltpu.PrefetchScalarGridSpec(
                num_scalar_prefetch=0,
                grid=(N * C, D_out),
                in_specs=[pl.BlockSpec((1, 1, H, W), in_index_map)],
                out_specs=pl.BlockSpec((1, 1, H_out, W_out),
                                       lambda b, d: (b, d, 0, 0)),
            ),
            compiler_params=pltpu.CompilerParams(
                dimension_semantics=("parallel", "parallel"),
                vmem_limit_bytes=int(vmem_limit)),
        )(x2)

    return out2.reshape(N, C, D_out, H_out, W_out)


if __name__ == "__main__":
    key = jax.random.PRNGKey(0)
    N, C, D, H, W = 2, 4, 8, 16, 16
    x = jax.random.normal(key, (N, C, D, H, W), dtype=jnp.float32)

    def ref_pad(x, pad):
        x_a, x_b, y_a, y_b, z_a, z_b = pad
        return jnp.pad(x, ((0, 0), (0, 0), (z_a, z_b), (y_a, y_b), (x_a, x_b)))

    # 1) Primary (whole-volume-per-step) path.
    pad = (1, 2, 2, 1, 1, 3)  # (x_a, x_b, y_a, y_b, z_a, z_b)
    out = jax.block_until_ready(zero_pad3d(x, pad))
    ref = ref_pad(x, pad)
    assert out.shape == ref.shape, (out.shape, ref.shape)
    assert out.dtype == x.dtype
    assert jnp.array_equal(out, ref), "primary path mismatch vs reference"

    # 2) Primary path with some zero-sized pads (exercises skipped border stores).
    pad2 = (0, 0, 3, 0, 0, 2)
    out2 = jax.block_until_ready(zero_pad3d(x, pad2))
    assert jnp.array_equal(out2, ref_pad(x, pad2)), "zero-pad-edge mismatch"

    # 3) Fallback (per-depth-slice) path, forced via a tiny per-step budget.
    out3 = jax.block_until_ready(zero_pad3d(x, pad, max_block_bytes=1))
    assert jnp.array_equal(out3, ref), "fallback path mismatch vs reference"

    print("KERNEL_OK")
</pallas_src>

<mosaic_0001>
module attributes {stable_mosaic.version = 11 : i64} {
  func.func @_pad_full_kernel(%arg0: i32, %arg1: memref<1x8x16x16xf32, #tpu.memory_space<vmem>>, %arg2: memref<1x12x19x19xf32, #tpu.memory_space<vmem>>) attributes {dimension_semantics = [#tpu.dimension_semantics<parallel>], iteration_bounds = array<i64: 8>, scalar_prefetch = 0 : i64, scratch_operands = 0 : i64, tpu.core_type = #tpu.core_type<tc>, window_params = [{transform_indices = @transform_0, window_bounds = array<i64: 1, 8, 16, 16>}, {transform_indices = @transform_1, window_bounds = array<i64: 1, 12, 19, 19>}]} {
    %cst = arith.constant 0.000000e+00 : f32
    %0 = vector.broadcast %cst : f32 to vector<1x19x19xf32>
    %c0 = arith.constant 0 : index
    %c0_0 = arith.constant 0 : index
    %c0_1 = arith.constant 0 : index
    %c0_2 = arith.constant 0 : index
    %1 = vector.load %arg2[%c0, %c0_0, %c0_1, %c0_2] : memref<1x12x19x19xf32, #tpu.memory_space<vmem>>, vector<1x1x19x19xf32>
    %2 = vector.shape_cast %1 : vector<1x1x19x19xf32> to vector<1x19x19xf32>
    %3 = vector.shape_cast %0 : vector<1x19x19xf32> to vector<1x1x19x19xf32>
    tpu.vector_store %arg2[%c0, %c0_0, %c0_1, %c0_2], %3 {strides = array<i32>} : memref<1x12x19x19xf32, #tpu.memory_space<vmem>>, vector<1x1x19x19xf32>,
    %cst_3 = arith.constant 0.000000e+00 : f32
    %4 = vector.broadcast %cst_3 : f32 to vector<3x19x19xf32>
    %c0_4 = arith.constant 0 : index
    %c9 = arith.constant 9 : index
    %c0_5 = arith.constant 0 : index
    %c0_6 = arith.constant 0 : index
    %5 = vector.load %arg2[%c0_4, %c9, %c0_5, %c0_6] : memref<1x12x19x19xf32, #tpu.memory_space<vmem>>, vector<1x3x19x19xf32>
    %6 = vector.shape_cast %5 : vector<1x3x19x19xf32> to vector<3x19x19xf32>
    %7 = vector.shape_cast %4 : vector<3x19x19xf32> to vector<1x3x19x19xf32>
    tpu.vector_store %arg2[%c0_4, %c9, %c0_5, %c0_6], %7 {strides = array<i32>} : memref<1x12x19x19xf32, #tpu.memory_space<vmem>>, vector<1x3x19x19xf32>,
    %cst_7 = arith.constant 0.000000e+00 : f32
    %8 = vector.broadcast %cst_7 : f32 to vector<8x2x19xf32>
    %c0_8 = arith.constant 0 : index
    %c1 = arith.constant 1 : index
    %c0_9 = arith.constant 0 : index
    %c0_10 = arith.constant 0 : index
    %9 = vector.load %arg2[%c0_8, %c1, %c0_9, %c0_10] : memref<1x12x19x19xf32, #tpu.memory_space<vmem>>, vector<1x8x2x19xf32>
    %10 = vector.shape_cast %9 : vector<1x8x2x19xf32> to vector<8x2x19xf32>
    %11 = vector.shape_cast %8 : vector<8x2x19xf32> to vector<1x8x2x19xf32>
    tpu.vector_store %arg2[%c0_8, %c1, %c0_9, %c0_10], %11 {strides = array<i32>} : memref<1x12x19x19xf32, #tpu.memory_space<vmem>>, vector<1x8x2x19xf32>,
    %cst_11 = arith.constant 0.000000e+00 : f32
    %12 = vector.broadcast %cst_11 : f32 to vector<8x1x19xf32>
    %c0_12 = arith.constant 0 : index
    %c1_13 = arith.constant 1 : index
    %c18 = arith.constant 18 : index
    %c0_14 = arith.constant 0 : index
    %13 = vector.load %arg2[%c0_12, %c1_13, %c18, %c0_14] : memref<1x12x19x19xf32, #tpu.memory_space<vmem>>, vector<1x8x1x19xf32>
    %14 = vector.shape_cast %13 : vector<1x8x1x19xf32> to vector<8x1x19xf32>
    %15 = vector.shape_cast %12 : vector<8x1x19xf32> to vector<1x8x1x19xf32>
    tpu.vector_store %arg2[%c0_12, %c1_13, %c18, %c0_14], %15 {strides = array<i32>} : memref<1x12x19x19xf32, #tpu.memory_space<vmem>>, vector<1x8x1x19xf32>,
    %cst_15 = arith.constant 0.000000e+00 : f32
    %16 = vector.broadcast %cst_15 : f32 to vector<8x16x1xf32>
    %c0_16 = arith.constant 0 : index
    %c1_17 = arith.constant 1 : index
    %c2 = arith.constant 2 : index
    %c0_18 = arith.constant 0 : index
    %17 = vector.load %arg2[%c0_16, %c1_17, %c2, %c0_18] : memref<1x12x19x19xf32, #tpu.memory_space<vmem>>, vector<1x8x16x1xf32>
    %18 = vector.shape_cast %17 : vector<1x8x16x1xf32> to vector<8x16x1xf32>
    %19 = vector.shape_cast %16 : vector<8x16x1xf32> to vector<1x8x16x1xf32>
    tpu.vector_store %arg2[%c0_16, %c1_17, %c2, %c0_18], %19 {strides = array<i32>} : memref<1x12x19x19xf32, #tpu.memory_space<vmem>>, vector<1x8x16x1xf32>,
    %cst_19 = arith.constant 0.000000e+00 : f32
    %20 = vector.broadcast %cst_19 : f32 to vector<8x16x2xf32>
    %c0_20 = arith.constant 0 : index
    %c1_21 = arith.constant 1 : index
    %c2_22 = arith.constant 2 : index
    %c17 = arith.constant 17 : index
    %21 = vector.load %arg2[%c0_20, %c1_21, %c2_22, %c17] : memref<1x12x19x19xf32, #tpu.memory_space<vmem>>, vector<1x8x16x2xf32>
    %22 = vector.shape_cast %21 : vector<1x8x16x2xf32> to vector<8x16x2xf32>
    %23 = vector.shape_cast %20 : vector<8x16x2xf32> to vector<1x8x16x2xf32>
    tpu.vector_store %arg2[%c0_20, %c1_21, %c2_22, %c17], %23 {strides = array<i32>} : memref<1x12x19x19xf32, #tpu.memory_space<vmem>>, vector<1x8x16x2xf32>,
    %c0_23 = arith.constant 0 : index
    %c0_24 = arith.constant 0 : index
    %c0_25 = arith.constant 0 : index
    %c0_26 = arith.constant 0 : index
    %24 = vector.load %arg1[%c0_23, %c0_24, %c0_25, %c0_26] : memref<1x8x16x16xf32, #tpu.memory_space<vmem>>, vector<1x8x16x16xf32>
    %25 = vector.shape_cast %24 : vector<1x8x16x16xf32> to vector<8x16x16xf32>
    %c0_27 = arith.constant 0 : index
    %c1_28 = arith.constant 1 : index
    %c2_29 = arith.constant 2 : index
    %c1_30 = arith.constant 1 : index
    %26 = vector.load %arg2[%c0_27, %c1_28, %c2_29, %c1_30] : memref<1x12x19x19xf32, #tpu.memory_space<vmem>>, vector<1x8x16x16xf32>
    %27 = vector.shape_cast %26 : vector<1x8x16x16xf32> to vector<8x16x16xf32>
    %28 = vector.shape_cast %25 : vector<8x16x16xf32> to vector<1x8x16x16xf32>
    tpu.vector_store %arg2[%c0_27, %c1_28, %c2_29, %c1_30], %28 {strides = array<i32>} : memref<1x12x19x19xf32, #tpu.memory_space<vmem>>, vector<1x8x16x16xf32>,
    return
  }
  func.func @transform_0(%arg0: i32) -> (i32, i32, i32, i32) {
    %c0_i32 = arith.constant 0 : i32
    %c0_i32_0 = arith.constant 0 : i32
    %c0_i32_1 = arith.constant 0 : i32
    %c0_i32_2 = arith.constant 0 : i32
    return %arg0, %c0_i32, %c0_i32_0, %c0_i32_1 : i32, i32, i32, i32
  }
  func.func @transform_1(%arg0: i32) -> (i32, i32, i32, i32) {
    %c0_i32 = arith.constant 0 : i32
    %c0_i32_0 = arith.constant 0 : i32
    %c0_i32_1 = arith.constant 0 : i32
    %c0_i32_2 = arith.constant 0 : i32
    return %arg0, %c0_i32, %c0_i32_0, %c0_i32_1 : i32, i32, i32, i32
  }
}

</mosaic_0001>

<llo_original>
// kernel: tpu_custom_call.1
$region0: #{tpu_custom_call.1}
  #allocation0 [shape = 'u32[]', space=smem, size = 0x4, offset = 0x4, fixed_abs, tag = 'smem constant byte address 0x4 - core index']
  #allocation1 [shape = 'u32[144,128]{1,0:T(1,128)}', space=vmem, size = 0x12000, scoped, tag = 'internal scratch']
  %s0 = inlined_call_operand.hbm [shape: f32[8,8,16,16], index: 0, kind: input, shape index: {}]
  %s1 = inlined_call_operand.vmem [shape: f32[8,12,19,19], index: 1, kind: output, shape index: {}]
  %s2 = sld [smem:[#allocation0]]
  $region41: #{tpu_custom_call.1} parent=0
    _
  %s4 = ssub.s32 1, %s2
  %s5 = scalar_select 0, %s4, %s2
  $region1: #{tpu_custom_call.1} parent=0
    #allocation2 [shape = 'u8[131072]{0}', space=vmem, size = 0x20000, scoped, tag = 'input window, operand 0']
    #allocation3 [shape = 's32[2]{0}', space=sflag, size = 0x8, scoped, tag = 'scoped memory for tpu_custom_call.1']
    %6 = vsyncpa [#allocation3], 0
    %s7 = scalar_lea.sflag [#allocation3], 1
    %8 = vsyncpa %s7, 0
    loop: start=0, step=1, limit=10
    $region2: #{tpu_custom_call.1} parent=1 // loop_pre_header
      _
    $region3: #{tpu_custom_call.1} parent=1 // loop_header
      %s10 = sphi 0, %s14
      %p11 = scmp.ge.s32.totalorder %s10, 10
      %s20 = sphi 0, %s22
      %s23 = sphi 0, %s20
      %s24 = sphi 0, %s23
      %s40 = sphi 0, %s24
      %s46 = sphi 0, %s48
      %s49 = sphi 0, %s46
      %s50 = sphi 0, %s49
      %s66 = sphi 0, %s50
    $region4: #{tpu_custom_call.1} parent=1 // loop_header_branch
      %13 = sbr.rel (%p11) target = $region8
    $region5: #{tpu_custom_call.1} parent=1 // loop_body
      %s15 = ssub.s32 %s10, 1
      %s16 = ssub.s32 %s10, 2
      %s17 = sadd.s32 %s10, 1
      %s18 = ssub.s32 %s10, %s17
      %p19 = scmp.eq.s32.totalorder %s18, 0
      %s21 = sadd.s32 %s20, 1
      %s22 = scalar_select %p19, %s20, %s21
      %p25 = pneg %p19
      %p26 = scmp.eq.s32.totalorder %s10, 7
      %p27 = por %p25, %p26
      %p28 = scmp.ne.s32.totalorder %s20, %s23
      %p29 = scmp.eq.s32.totalorder %s10, 0
      %p30 = por %p28, %p29
      %p31 = scmp.ne.s32.totalorder %s20, %s23
      %p32 = scmp.eq.s32.totalorder %s15, 7
      %p33 = por %p31, %p32
      %p34 = scmp.ne.s32.totalorder %s23, %s24
      %p35 = scmp.eq.s32.totalorder %s15, 0
      %p36 = por %p34, %p35
      %p37 = scmp.ne.s32.totalorder %s23, %s24
      %p38 = scmp.eq.s32.totalorder %s16, 7
      %p39 = por %p37, %p38
      %p41 = scmp.ne.s32.totalorder %s24, %s40
      %p42 = scmp.eq.s32.totalorder %s16, 0
      %p43 = por %p41, %p42
      %s44 = ssub.s32 %s10, %s17
      %p45 = scmp.eq.s32.totalorder %s44, 0
      %s47 = sadd.s32 %s46, 1
      %s48 = scalar_select %p45, %s46, %s47
      %p51 = pneg %p45
      %p52 = scmp.eq.s32.totalorder %s10, 7
      %p53 = por %p51, %p52
      %p54 = scmp.ne.s32.totalorder %s46, %s49
      %p55 = scmp.eq.s32.totalorder %s10, 0
      %p56 = por %p54, %p55
      %p57 = scmp.ne.s32.totalorder %s46, %s49
      %p58 = scmp.eq.s32.totalorder %s15, 7
      %p59 = por %p57, %p58
      %p60 = scmp.ne.s32.totalorder %s49, %s50
      %p61 = scmp.eq.s32.totalorder %s15, 0
      %p62 = por %p60, %p61
      %p63 = scmp.ne.s32.totalorder %s49, %s50
      %p64 = scmp.eq.s32.totalorder %s16, 7
      %p65 = por %p63, %p64
      %p67 = scmp.ne.s32.totalorder %s50, %s66
      %p68 = scmp.eq.s32.totalorder %s16, 0
      %p69 = por %p67, %p68
      %p70 = scmp.le.s32.totalorder 1, %s10
      %p71 = scmp.lt.s32.totalorder %s10, 9
      %p72 = pnand %p70, %p71
      %p73 = pneg %p72
      // Predicated region
      $region9: #{tpu_custom_call.1} parent=5 // pred_check
        _
      $region10: #{tpu_custom_call.1} parent=5 // pred_check_branch
        %75 = sbr.rel (%p72) target = $region12
      $region11: #{tpu_custom_call.1} parent=5 // pred_region
        %s76 = ssub.s32 %s10, 1
      $region12: #{tpu_custom_call.1} parent=5 // pred_fallthru
        _
      %p77 = scmp.lt.s32.totalorder %s10, 8
      // Predicated region
      $region13: #{tpu_custom_call.1} parent=5 // pred_check
        %p78 = pneg %p77
      $region14: #{tpu_custom_call.1} parent=5 // pred_check_branch
        %80 = sbr.rel (%p78) target = $region16
      $region15: #{tpu_custom_call.1} parent=5 // pred_region
        // Predicated region
        $region17: #{tpu_custom_call.1} parent=15 // pred_check
          %p81 = pneg %p30
        $region18: #{tpu_custom_call.1} parent=15 // pred_check_branch
          %83 = sbr.rel (%p81) target = $region20
        $region19: #{tpu_custom_call.1} parent=15 // pred_region
          %s84 = sand.u32 %s20, 1
          %s85 = scalar_lea.sflag [#allocation3], %s84
          %s86 = sand.u32 %s20, 1
          %s87 = smul.addr %s86, 128
          %s88 = scalar_lea.vmem [#allocation2], %s87
          %s90 = ssub.s32 2048, 2048
          %91 = vsyncadd %s85, %s90
          %s92 = smul.addr %s10, 16
          %s93 = smul.addr %s92, 128
          %s94 = scalar_lea.hbm %s0, %s93
          %s95 = sshll.u32 %s88, 4
          %s96 = int_to_ptr.vmem [resolvable:$true] %s95
          %101 = dma.hbm_to_vmem [thread:$0]  %s94, 2048, %s96, %s85, 128, 128, 8
        $region20: #{tpu_custom_call.1} parent=15 // pred_fallthru
          _
      $region16: #{tpu_custom_call.1} parent=5 // pred_fallthru
        _
      %p102 = scmp.le.s32.totalorder 1, %s10
      %p103 = scmp.lt.s32.totalorder %s10, 9
      %p104 = pnand %p102, %p103
      %p105 = pneg %p104
      // Predicated region
      $region21: #{tpu_custom_call.1} parent=5 // pred_check
        _
      $region22: #{tpu_custom_call.1} parent=5 // pred_check_branch
        %107 = sbr.rel (%p104) target = $region24
      $region23: #{tpu_custom_call.1} parent=5 // pred_region
        %s108 = ssub.s32 %s10, 1
        %s109 = sand.u32 %s23, 1
        %s110 = scalar_lea.sflag [#allocation3], %s109
        %s111 = sand.u32 %s23, 1
        %s112 = smul.addr %s111, 128
        %s113 = scalar_lea.vmem [#allocation2], %s112
        // Predicated region
        $region25: #{tpu_custom_call.1} parent=23 // pred_check
          %p114 = pneg %p36
        $region26: #{tpu_custom_call.1} parent=23 // pred_check_branch
          %116 = sbr.rel (%p114) target = $region28
        $region27: #{tpu_custom_call.1} parent=23 // pred_region
          %117 = dma.done %s110, 2048
        $region28: #{tpu_custom_call.1} parent=23 // pred_fallthru
          _
        %s118 = sand.u32 %s23, 1
        %s119 = scalar_lea.sflag [#allocation3], %s118
        %s120 = sand.u32 %s23, 1
        %s121 = smul.addr %s120, 128
        %s122 = scalar_lea.vmem [#allocation2], %s121
        %p123 = pneg %p36
        %p124 = pneg %p33
        %p125 = pneg %p62
        %p126 = pneg %p59
        %p127 = scmp.lt.s32.totalorder %s15, 7
        %s128 = scalar_select %p127, %s15, 7
        %s129 = smul.addr %s128, 36
        %s130 = smul.addr %s129, 8
        %s131 = scalar_lea.vmem %s1, %s130
        %p132 = scmp.lt.s32.totalorder %s15, 7
        %s133 = scalar_select %p132, %s15, 7
        %s134 = smul.addr %s133, 36
        %s135 = smul.addr %s134, 8
        %s136 = scalar_lea.vmem %s1, %s135
        %vm137 = vcmask 154624
        %138 = vst.msk [vmem:[%s136] sm:$0xff] %vm137, 0.0
        %139 = vst.msk [vmem:[%s136 + $0x8] sm:$0xff] %vm137, 0.0
        %vm140 = vcmask 149504
        %141 = vst.msk [vmem:[%s136 + $0x10] sm:$0x7] %vm140, 0.0
        %s142 = scalar_lea.vmem %s136, 216
        %143 = vst.msk [vmem:[%s142] sm:$0xff] %vm137, 0.0
        %144 = vst.msk [vmem:[%s142 + $0x8] sm:$0xff] %vm137, 0.0
        %145 = vst.msk [vmem:[%s142 + $0x10] sm:$0x7] %vm140, 0.0
        %146 = vst.msk [vmem:[%s142 + $0x18] sm:$0xff] %vm137, 0.0
        %147 = vst.msk [vmem:[%s142 + $0x20] sm:$0xff] %vm137, 0.0
        %148 = vst.msk [vmem:[%s142 + $0x28] sm:$0x7] %vm140, 0.0
        %149 = vst.msk [vmem:[%s142 + $0x30] sm:$0xff] %vm137, 0.0
        %150 = vst.msk [vmem:[%s142 + $0x38] sm:$0xff] %vm137, 0.0
        %151 = vst.msk [vmem:[%s142 + $0x40] sm:$0x7] %vm140, 0.0
        %s152 = scalar_lea.vmem %s136, 24
        %vm153 = vcmask 148480
        %154 = vst.msk [vmem:[%s152] sm:$0x3] %vm153, 0.0
        %155 = vst.msk [vmem:[%s152 + $0x18] sm:$0x3] %vm153, 0.0
        %156 = vst.msk [vmem:[%s152 + $0x30] sm:$0x3] %vm153, 0.0
        %157 = vst.msk [vmem:[%s152 + $0x48] sm:$0x3] %vm153, 0.0
        %158 = vst.msk [vmem:[%s152 + $0x60] sm:$0x3] %vm153, 0.0
        %159 = vst.msk [vmem:[%s152 + $0x78] sm:$0x3] %vm153, 0.0
        %160 = vst.msk [vmem:[%s152 + $0x90] sm:$0x3] %vm153, 0.0
        %161 = vst.msk [vmem:[%s152 + $0xa8] sm:$0x3] %vm153, 0.0
        %vm162 = vcmask 147456
        %163 = vst.msk [vmem:[%s152 + $0x12] sm:$0x1] %vm162, 0.0
        %164 = vst.msk [vmem:[%s152 + $0x2a] sm:$0x1] %vm162, 0.0
        %165 = vst.msk [vmem:[%s152 + $0x42] sm:$0x1] %vm162, 0.0
        %166 = vst.msk [vmem:[%s152 + $0x5a] sm:$0x1] %vm162, 0.0
        %167 = vst.msk [vmem:[%s152 + $0x72] sm:$0x1] %vm162, 0.0
        %168 = vst.msk [vmem:[%s152 + $0x8a] sm:$0x1] %vm162, 0.0
        %169 = vst.msk [vmem:[%s152 + $0xa2] sm:$0x1] %vm162, 0.0
        %170 = vst.msk [vmem:[%s152 + $0xba] sm:$0x1] %vm162, 0.0
        %vm171 = vcmask 7168
        %172 = vst.msk [vmem:[%s152 + $0x2] sm:$0xff] %vm171, 0.0
        %173 = vst.msk [vmem:[%s152 + $0xa] sm:$0xff] %vm171, 0.0
        %174 = vst.msk [vmem:[%s152 + $0x1a] sm:$0xff] %vm171, 0.0
        %175 = vst.msk [vmem:[%s152 + $0x22] sm:$0xff] %vm171, 0.0
        %176 = vst.msk [vmem:[%s152 + $0x32] sm:$0xff] %vm171, 0.0
        %177 = vst.msk [vmem:[%s152 + $0x3a] sm:$0xff] %vm171, 0.0
        %178 = vst.msk [vmem:[%s152 + $0x4a] sm:$0xff] %vm171, 0.0
        %179 = vst.msk [vmem:[%s152 + $0x52] sm:$0xff] %vm171, 0.0
        %180 = vst.msk [vmem:[%s152 + $0x62] sm:$0xff] %vm171, 0.0
        %181 = vst.msk [vmem:[%s152 + $0x6a] sm:$0xff] %vm171, 0.0
        %182 = vst.msk [vmem:[%s152 + $0x7a] sm:$0xff] %vm171, 0.0
        %183 = vst.msk [vmem:[%s152 + $0x82] sm:$0xff] %vm171, 0.0
        %184 = vst.msk [vmem:[%s152 + $0x92] sm:$0xff] %vm171, 0.0
        %185 = vst.msk [vmem:[%s152 + $0x9a] sm:$0xff] %vm171, 0.0
        %186 = vst.msk [vmem:[%s152 + $0xaa] sm:$0xff] %vm171, 0.0
        %187 = vst.msk [vmem:[%s152 + $0xb2] sm:$0xff] %vm171, 0.0
        %vm188 = vcmask 154760
        %189 = vst.msk [vmem:[%s152 + $0x2] sm:$0xff] %vm188, 0.0
        %190 = vst.msk [vmem:[%s152 + $0xa] sm:$0xff] %vm188, 0.0
        %191 = vst.msk [vmem:[%s152 + $0x1a] sm:$0xff] %vm188, 0.0
        %192 = vst.msk [vmem:[%s152 + $0x22] sm:$0xff] %vm188, 0.0
        %193 = vst.msk [vmem:[%s152 + $0x32] sm:$0xff] %vm188, 0.0
        %194 = vst.msk [vmem:[%s152 + $0x3a] sm:$0xff] %vm188, 0.0
        %195 = vst.msk [vmem:[%s152 + $0x4a] sm:$0xff] %vm188, 0.0
        %196 = vst.msk [vmem:[%s152 + $0x52] sm:$0xff] %vm188, 0.0
        %197 = vst.msk [vmem:[%s152 + $0x62] sm:$0xff] %vm188, 0.0
        %198 = vst.msk [vmem:[%s152 + $0x6a] sm:$0xff] %vm188, 0.0
        %199 = vst.msk [vmem:[%s152 + $0x7a] sm:$0xff] %vm188, 0.0
        %200 = vst.msk [vmem:[%s152 + $0x82] sm:$0xff] %vm188, 0.0
        %201 = vst.msk [vmem:[%s152 + $0x92] sm:$0xff] %vm188, 0.0
        %202 = vst.msk [vmem:[%s152 + $0x9a] sm:$0xff] %vm188, 0.0
        %203 = vst.msk [vmem:[%s152 + $0xaa] sm:$0xff] %vm188, 0.0
        %204 = vst.msk [vmem:[%s152 + $0xb2] sm:$0xff] %vm188, 0.0
        %v205 = vld [vmem:[%s113] sm:$0xff]
        %v206 = vld [vmem:[%s113 + $0x8] sm:$0xff]
        %v207 = vld [vmem:[%s113 + $0x10] sm:$0xff]
        %v208 = vld [vmem:[%s113 + $0x18] sm:$0xff]
        %v209 = vld [vmem:[%s113 + $0x20] sm:$0xff]
        %v210 = vld [vmem:[%s113 + $0x28] sm:$0xff]
        %v211 = vld [vmem:[%s113 + $0x30] sm:$0xff]
        %v212 = vld [vmem:[%s113 + $0x38] sm:$0xff]
        %v213 = vld [vmem:[%s113 + $0x40] sm:$0xff]
        %v214 = vld [vmem:[%s113 + $0x48] sm:$0xff]
        %v215 = vld [vmem:[%s113 + $0x50] sm:$0xff]
        %v216 = vld [vmem:[%s113 + $0x58] sm:$0xff]
        %v217 = vld [vmem:[%s113 + $0x60] sm:$0xff]
        %v218 = vld [vmem:[%s113 + $0x68] sm:$0xff]
        %v219 = vld [vmem:[%s113 + $0x70] sm:$0xff]
        %v220 = vld [vmem:[%s113 + $0x78] sm:$0xff]
        %237 = vrot.lane.b32.xlu0 %v205, 1
        %v238 = vpop.permute.xlu0 %237
        %239 = vrot.lane.b32.xlu0 %v206, 1
        %v240 = vpop.permute.xlu0 %239
        %241 = vrot.lane.b32.xlu0 %v207, 1
        %v242 = vpop.permute.xlu0 %241
        %243 = vrot.lane.b32.xlu0 %v208, 1
        %v244 = vpop.permute.xlu0 %243
        %245 = vrot.lane.b32.xlu0 %v209, 1
        %v246 = vpop.permute.xlu0 %245
        %247 = vrot.lane.b32.xlu0 %v210, 1
        %v248 = vpop.permute.xlu0 %247
        %249 = vrot.lane.b32.xlu0 %v211, 1
        %v250 = vpop.permute.xlu0 %249
        %251 = vrot.lane.b32.xlu0 %v212, 1
        %v252 = vpop.permute.xlu0 %251
        %253 = vrot.lane.b32.xlu0 %v213, 1
        %v254 = vpop.permute.xlu0 %253
        %255 = vrot.lane.b32.xlu0 %v214, 1
        %v256 = vpop.permute.xlu0 %255
        %257 = vrot.lane.b32.xlu0 %v215, 1
        %v258 = vpop.permute.xlu0 %257
        %259 = vrot.lane.b32.xlu0 %v216, 1
        %v260 = vpop.permute.xlu0 %259
        %261 = vrot.lane.b32.xlu0 %v217, 1
        %v262 = vpop.permute.xlu0 %261
        %263 = vrot.lane.b32.xlu0 %v218, 1
        %v264 = vpop.permute.xlu0 %263
        %265 = vrot.lane.b32.xlu0 %v219, 1
        %v266 = vpop.permute.xlu0 %265
        %267 = vrot.lane.b32.xlu0 %v220, 1
        %v268 = vpop.permute.xlu0 %267
        %vm285 = vcmask 138248
        %286 = vst.msk [vmem:[%s152 + $0x2] sm:$0xff] %vm285, %v238
        %287 = vst.msk [vmem:[%s152 + $0xa] sm:$0xff] %vm285, %v240
        %288 = vst.msk [vmem:[%s152 + $0x1a] sm:$0xff] %vm285, %v242
        %289 = vst.msk [vmem:[%s152 + $0x22] sm:$0xff] %vm285, %v244
        %290 = vst.msk [vmem:[%s152 + $0x32] sm:$0xff] %vm285, %v246
        %291 = vst.msk [vmem:[%s152 + $0x3a] sm:$0xff] %vm285, %v248
        %292 = vst.msk [vmem:[%s152 + $0x4a] sm:$0xff] %vm285, %v250
        %293 = vst.msk [vmem:[%s152 + $0x52] sm:$0xff] %vm285, %v252
        %294 = vst.msk [vmem:[%s152 + $0x62] sm:$0xff] %vm285, %v254
        %295 = vst.msk [vmem:[%s152 + $0x6a] sm:$0xff] %vm285, %v256
        %296 = vst.msk [vmem:[%s152 + $0x7a] sm:$0xff] %vm285, %v258
        %297 = vst.msk [vmem:[%s152 + $0x82] sm:$0xff] %vm285, %v260
        %298 = vst.msk [vmem:[%s152 + $0x92] sm:$0xff] %vm285, %v262
        %299 = vst.msk [vmem:[%s152 + $0x9a] sm:$0xff] %vm285, %v264
        %300 = vst.msk [vmem:[%s152 + $0xaa] sm:$0xff] %vm285, %v266
        %301 = vst.msk [vmem:[%s152 + $0xb2] sm:$0xff] %vm285, %v268
        %p302 = scmp.lt.s32.totalorder %s15, 7
        %s303 = scalar_select %p302, %s15, 7
        %s304 = smul.addr %s303, 36
        %s305 = smul.addr %s304, 8
        %s306 = scalar_lea.vmem %s1, %s305
        // Predicated region
        $region29: #{tpu_custom_call.1} parent=23 // pred_check
          %p307 = pneg %p59
        $region30: #{tpu_custom_call.1} parent=23 // pred_check_branch
          %309 = sbr.rel (%p307) target = $region32
        $region31: #{tpu_custom_call.1} parent=23 // pred_region
          _
        $region32: #{tpu_custom_call.1} parent=23 // pred_fallthru
          _
      $region24: #{tpu_custom_call.1} parent=5 // pred_fallthru
        _
      %p310 = scmp.le.s32.totalorder 2, %s10
      // Predicated region
      $region33: #{tpu_custom_call.1} parent=5 // pred_check
        %p311 = pneg %p310
      $region34: #{tpu_custom_call.1} parent=5 // pred_check_branch
        %313 = sbr.rel (%p311) target = $region36
      $region35: #{tpu_custom_call.1} parent=5 // pred_region
        %s314 = ssub.s32 %s10, 2
        // Predicated region
        $region37: #{tpu_custom_call.1} parent=35 // pred_check
          %p315 = pneg %p65
        $region38: #{tpu_custom_call.1} parent=35 // pred_check_branch
          %317 = sbr.rel (%p315) target = $region40
        $region39: #{tpu_custom_call.1} parent=35 // pred_region
          %p318 = scmp.lt.s32.totalorder %s16, 7
          %s319 = scalar_select %p318, %s16, 7
          %s320 = smul.addr %s319, 36
          %s321 = smul.addr %s320, 8
          %s322 = scalar_lea.vmem %s1, %s321
        $region40: #{tpu_custom_call.1} parent=35 // pred_fallthru
          _
      $region36: #{tpu_custom_call.1} parent=5 // pred_fallthru
        _
    $region6: #{tpu_custom_call.1} parent=1 // loop_footer
      %s14 = sadd.s32 1, %s10
    $region7: #{tpu_custom_call.1} parent=1 // loop_footer_branch
      %9 = sbr.rel target = $region3
    $region8: #{tpu_custom_call.1} parent=1 // loop_exit
      _
    %323 = vsyncpa [#allocation3], 1
    %s324 = scalar_lea.sflag [#allocation3], 1
    %325 = vsyncpa %s324, 1

</llo_original>
